<compile_context>
chip_gen: v6e
topology: v6e:2x2x1
jax: 0.10.0
libtpu: 0.0.40
codegen_flags: <defaults>
</compile_context>

<pallas_src>
import functools

import jax
import jax.numpy as jnp
import numpy as np
from jax.experimental import pallas as pl
from jax.experimental.pallas import tpu as pltpu

_MIB = 1024 * 1024
_VMEM_BUDGET = 40 * _MIB        # conservative resident budget (fits v7x 64 MiB/TC)
_VMEM_LIMIT_BYTES = 48 * _MIB   # scoped-VMEM limit requested from Mosaic


# --------------------------------------------------------------------------
# Path 1: everything VMEM-resident.  grid = (D-tiles, layers).
#   A_half:  constant block index  -> DMA'd once, resident.
#   final_x: output block is the f32 accumulator, resident across the layer
#            axis, written back to HBM once per D-tile.
#   x:       f32 VMEM scratch, re-initialized at layer 0 of each D-tile.
# --------------------------------------------------------------------------
def _fused_resident_kernel(a_ref, x0_ref, fin_ref, x_scr, *,
                           num_layers, inv_scale, matmul_dtype):
    layer = pl.program_id(1)

    @pl.when(layer == 0)
    def _init():
        x0 = x0_ref[...]
        x_scr[...] = x0
        fin_ref[...] = x0

    x_new = jnp.dot(
        a_ref[...],
        x_scr[...].astype(matmul_dtype),
        preferred_element_type=jnp.float32,
    )
    x_scr[...] = x_new
    fin_new = fin_ref[...] + x_new

    @pl.when(layer < num_layers - 1)
    def _acc():
        fin_ref[...] = fin_new

    @pl.when(layer == num_layers - 1)
    def _finalize():
        fin_ref[...] = fin_new * jnp.float32(inv_scale)


def _run_fused_resident(a_p, x_p, num_layers, inv_scale, matmul_dtype, td):
    n_pad, d_pad = x_p.shape
    grid = (d_pad // td, num_layers)
    kernel = functools.partial(
        _fused_resident_kernel,
        num_layers=num_layers, inv_scale=inv_scale, matmul_dtype=matmul_dtype)
    return pl.pallas_call(
        kernel,
        out_shape=jax.ShapeDtypeStruct((n_pad, d_pad), jnp.float32),
        grid=grid,
        in_specs=[
            pl.BlockSpec((n_pad, n_pad), lambda j, l: (0, 0)),   # A_half (resident)
            pl.BlockSpec((n_pad, td), lambda j, l: (0, j)),      # x0 (f32)
        ],
        out_specs=pl.BlockSpec((n_pad, td), lambda j, l: (0, j)),  # final_x
        scratch_shapes=[pltpu.VMEM((n_pad, td), jnp.float32)],      # x carry
        compiler_params=pltpu.CompilerParams(
            # D-tiles are independent across layers -> megacore split on v7x.
            dimension_semantics=("parallel", "arbitrary"),
            vmem_limit_bytes=_VMEM_LIMIT_BYTES,
        ),
    )(a_p, x_p)


# --------------------------------------------------------------------------
# Path 2: A streamed from HBM (once per layer), x / final_x resident in VMEM.
#   grid = (layers, M-tiles, K-tiles), all "arbitrary" (x_cur/x_next/final_x
#   live in per-core scratch, so the M axis cannot be megacore-split).
#   final_x is the (constant-index) output block: written back once at the end.
# --------------------------------------------------------------------------
def _fused_streaming_kernel(x0_ref, a_ref, fin_ref, x_cur, x_next, acc, *,
                            num_layers, inv_scale, tm, tk, matmul_dtype):
    layer = pl.program_id(0)
    i = pl.program_id(1)
    k = pl.program_id(2)
    nk = pl.num_programs(2)

    @pl.when((layer == 0) & (i == 0) & (k == 0))
    def _init():
        x0 = x0_ref[...]
        x_cur[...] = x0
        fin_ref[...] = x0

    @pl.when((layer > 0) & (i == 0) & (k == 0))
    def _advance():           # cheap VMEM copy once per layer: x_cur <- x_next
        x_cur[...] = x_next[...]

    @pl.when(k == 0)
    def _zero():
        acc[...] = jnp.zeros_like(acc)

    ks = pl.multiple_of(k * tk, 128)
    acc[...] += jnp.dot(
        a_ref[...],
        x_cur[pl.ds(ks, tk), :].astype(matmul_dtype),
        preferred_element_type=jnp.float32,
    )

    @pl.when(k == nk - 1)
    def _row_tile_done():
        row = pl.multiple_of(i * tm, 128)
        x_new = acc[...]
        x_next[pl.ds(row, tm), :] = x_new
        fin_new = fin_ref[pl.ds(row, tm), :] + x_new

        @pl.when(layer < num_layers - 1)
        def _():
            fin_ref[pl.ds(row, tm), :] = fin_new

        @pl.when(layer == num_layers - 1)
        def _():
            fin_ref[pl.ds(row, tm), :] = fin_new * jnp.float32(inv_scale)


def _run_fused_streaming(a_p, x_p, num_layers, inv_scale, matmul_dtype, tm, tk):
    n_pad, d_pad = x_p.shape
    grid = (num_layers, n_pad // tm, n_pad // tk)
    kernel = functools.partial(
        _fused_streaming_kernel,
        num_layers=num_layers, inv_scale=inv_scale, tm=tm, tk=tk,
        matmul_dtype=matmul_dtype)
    return pl.pallas_call(
        kernel,
        out_shape=jax.ShapeDtypeStruct((n_pad, d_pad), jnp.float32),
        grid=grid,
        in_specs=[
            pl.BlockSpec((n_pad, d_pad), lambda l, i, k: (0, 0)),  # x0 (read once)
            pl.BlockSpec((tm, tk), lambda l, i, k: (i, k)),        # A_half tiles
        ],
        # Constant block index -> resident f32 accumulator, one writeback at end.
        out_specs=pl.BlockSpec((n_pad, d_pad), lambda l, i, k: (0, 0)),
        scratch_shapes=[
            pltpu.VMEM((n_pad, d_pad), jnp.float32),   # x_cur
            pltpu.VMEM((n_pad, d_pad), jnp.float32),   # x_next
            pltpu.VMEM((tm, d_pad), jnp.float32),      # acc
        ],
        compiler_params=pltpu.CompilerParams(
            dimension_semantics=("arbitrary", "arbitrary", "arbitrary"),
            vmem_limit_bytes=_VMEM_LIMIT_BYTES,
        ),
    )(x_p, a_p)


# --------------------------------------------------------------------------
# JAX glue
# --------------------------------------------------------------------------
def _round_up(v, m):
    return (v + m - 1) // m * m


def _pick_tile(dim_pad, target):
    """Largest multiple of 128 <= target that divides dim_pad."""
    t = min(target, dim_pad)
    while dim_pad % t != 0:
        t -= 128
    return t


def _pick_td(d_pad):
    """Full D when small; otherwise >=2 parallel tiles (v7x megacore),
    preferring widths that are multiples of the 256-wide v6e/v7x MXU."""
    if d_pad <= 256:
        return d_pad
    for cand in (512, 256, 128):
        if d_pad % cand == 0 and d_pad // cand >= 2:
            return cand
    return d_pad


def _half_adjacency_padded(co_eindex, soc_eindex, num_nodes, n_pad, dtype):
    """A_half = 0.5*(A_co + A_soc), built with a single scatter into one padded
    (n_pad, n_pad) f32 buffer, then cast once to the matmul dtype."""
    def edge_w(eindex):
        dst = eindex[1]
        deg = jnp.zeros((num_nodes,), jnp.float32).at[dst].add(1.0)
        inv = jnp.where(deg > 0, 1.0 / deg, 0.0)
        return 0.5 * inv[dst]

    src = jnp.concatenate([co_eindex[0], soc_eindex[0]])
    dst = jnp.concatenate([co_eindex[1], soc_eindex[1]])
    w = jnp.concatenate([edge_w(co_eindex), edge_w(soc_eindex)])
    a = jnp.zeros((n_pad, n_pad), jnp.float32).at[dst, src].add(w)
    return a.astype(dtype)


def comp_lgcn(x, co_eindex, soc_eindex, num_layers, *,
              matmul_dtype=jnp.bfloat16, force_streaming=False):
    n, d = x.shape
    if num_layers == 0:
        return x

    n_pad = _round_up(n, 128)
    d_pad = _round_up(d, 128)
    isz = jnp.dtype(matmul_dtype).itemsize

    a_p = _half_adjacency_padded(co_eindex, soc_eindex, n, n_pad, matmul_dtype)
    x_p = jnp.zeros((n_pad, d_pad), jnp.float32).at[:n, :d].set(
        x.astype(jnp.float32))

    inv_scale = 1.0 / float(num_layers + 1)

    # Path 1 (A resident) VMEM estimate: A (2 bufs) + x0/fin blocks (2 bufs
    # each) + x carry scratch.
    td = _pick_td(d_pad)
    est_resident = (2 * n_pad * n_pad * isz
                    + 4 * n_pad * td * 4
                    + n_pad * td * 4)

    if (not force_streaming) and est_resident <= _VMEM_BUDGET:
        fin = _run_fused_resident(a_p, x_p, num_layers, inv_scale,
                                  matmul_dtype, td)
    else:
        tm = _pick_tile(n_pad, 512)
        tk = _pick_tile(n_pad, 512)
        # Path 2 estimate: A tiles (2) + x0 (2) + fin out (2) + x_cur + x_next + acc.
        est_stream = (2 * tm * tk * isz
                      + 6 * n_pad * d_pad * 4
                      + tm * d_pad * 4)
        if est_stream > _VMEM_BUDGET:
            # TODO(synk): production-scale graphs need the sparse CSR/gather
            # formulation (PrefetchScalarGridSpec) instead of dense N x N A_half.
            raise NotImplementedError(
                "Graph too large for the dense fused kernels; sparse path needed.")
        fin = _run_fused_streaming(a_p, x_p, num_layers, inv_scale,
                                   matmul_dtype, tm, tk)

    return fin[:n, :d].astype(x.dtype)


def comp_lgcn_reference(x, co_eindex, soc_eindex, num_layers):
    """Pure-JAX f32 reference (original two-matmul-per-layer formulation)."""
    n, _ = x.shape

    def norm_adj(eindex):
        dst = eindex[1]
        deg = jnp.zeros((n,), jnp.float32).at[dst].add(1.0)
        inv = jnp.where(deg > 0, 1.0 / deg, 0.0)
        w = inv[dst]
        return jnp.zeros((n, n), jnp.float32).at[dst, eindex[0]].add(w)

    a_co = norm_adj(co_eindex)
    a_soc = norm_adj(soc_eindex)
    xf = x.astype(jnp.float32)
    final_x = xf
    for _ in range(num_layers):
        xf = (a_co @ xf + a_soc @ xf) * 0.5
        final_x = final_x + xf
    return (final_x / float(num_layers + 1)).astype(x.dtype)


if __name__ == "__main__":
    key = jax.random.PRNGKey(0)
    k_x, k_co_s, k_co_d, k_soc_s, k_soc_d = jax.random.split(key, 5)

    num_nodes = 16       # N
    in_channels = 32     # D
    num_layers = 2
    num_edges_co = 40
    num_edges_soc = 48

    x = jax.random.normal(k_x, (num_nodes, in_channels), dtype=jnp.float32)
    co_eindex = jnp.stack(
        [jax.random.randint(k_co_s, (num_edges_co,), 0, num_nodes),
         jax.random.randint(k_co_d, (num_edges_co,), 0, num_nodes)],
        axis=0).astype(jnp.int32)
    soc_eindex = jnp.stack(
        [jax.random.randint(k_soc_s, (num_edges_soc,), 0, num_nodes),
         jax.random.randint(k_soc_d, (num_edges_soc,), 0, num_nodes)],
        axis=0).astype(jnp.int32)

    ref = jax.block_until_ready(
        comp_lgcn_reference(x, co_eindex, soc_eindex, num_layers))

    # Path 1 (A resident), exact f32 operands.
    out = jax.block_until_ready(
        comp_lgcn(x, co_eindex, soc_eindex, num_layers, matmul_dtype=jnp.float32))
    np.testing.assert_allclose(np.asarray(out), np.asarray(ref), rtol=1e-5, atol=1e-5)

    # Path 1, fast bf16 MXU operands (f32 accumulate, f32 x-carry).
    out = jax.block_until_ready(
        comp_lgcn(x, co_eindex, soc_eindex, num_layers))
    np.testing.assert_allclose(np.asarray(out), np.asarray(ref), rtol=5e-2, atol=5e-2)

    # Path 2 (A streamed, x/final_x VMEM-resident), exercised via force_streaming.
    out = jax.block_until_ready(
        comp_lgcn(x, co_eindex, soc_eindex, num_layers,
                  matmul_dtype=jnp.float32, force_streaming=True))
    np.testing.assert_allclose(np.asarray(out), np.asarray(ref), rtol=1e-5, atol=1e-5)

    out = jax.block_until_ready(
        comp_lgcn(x, co_eindex, soc_eindex, num_layers, force_streaming=True))
    np.testing.assert_allclose(np.asarray(out), np.asarray(ref), rtol=5e-2, atol=5e-2)

    print("KERNEL_OK")
</pallas_src>

<mosaic_0001>
module attributes {stable_mosaic.version = 11 : i64} {
  func.func @_fused_resident_kernel(%arg0: i32, %arg1: i32, %arg2: memref<128x128xf32, #tpu.memory_space<vmem>>, %arg3: memref<128x128xf32, #tpu.memory_space<vmem>>, %arg4: memref<128x128xf32, #tpu.memory_space<vmem>>, %arg5: memref<128x128xf32, #tpu.memory_space<vmem>>) attributes {dimension_semantics = [#tpu.dimension_semantics<parallel>, #tpu.dimension_semantics<arbitrary>], iteration_bounds = array<i64: 1, 2>, scalar_prefetch = 0 : i64, scratch_operands = 1 : i64, tpu.core_type = #tpu.core_type<tc>, window_params = [{pipeline_mode = #tpu.pipeline_mode<synchronous>, transform_indices = @transform_0, window_bounds = array<i64: 128, 128>}, {transform_indices = @transform_1, window_bounds = array<i64: 128, 128>}, {transform_indices = @transform_2, window_bounds = array<i64: 128, 128>}]} {
    %c0_i32 = arith.constant 0 : i32
    %0 = arith.cmpi eq, %arg1, %c0_i32 : i32
    %1 = arith.extui %0 : i1 to i32
    %c0_i32_0 = arith.constant 0 : i32
    %2 = arith.cmpi ne, %1, %c0_i32_0 : i32
    scf.if %2 {
      %c0_11 = arith.constant 0 : index
      %c0_12 = arith.constant 0 : index
      %15 = vector.load %arg3[%c0_11, %c0_12] : memref<128x128xf32, #tpu.memory_space<vmem>>, vector<128x128xf32>
      %c0_13 = arith.constant 0 : index
      %c0_14 = arith.constant 0 : index
      %16 = vector.load %arg5[%c0_13, %c0_14] : memref<128x128xf32, #tpu.memory_space<vmem>>, vector<128x128xf32>
      tpu.vector_store %arg5[%c0_13, %c0_14], %15 {strides = array<i32>} : memref<128x128xf32, #tpu.memory_space<vmem>>, vector<128x128xf32>,
      %c0_15 = arith.constant 0 : index
      %c0_16 = arith.constant 0 : index
      %17 = vector.load %arg4[%c0_15, %c0_16] : memref<128x128xf32, #tpu.memory_space<vmem>>, vector<128x128xf32>
      tpu.vector_store %arg4[%c0_15, %c0_16], %15 {strides = array<i32>} : memref<128x128xf32, #tpu.memory_space<vmem>>, vector<128x128xf32>,
    } else {
    }
    %c0 = arith.constant 0 : index
    %c0_1 = arith.constant 0 : index
    %3 = vector.load %arg2[%c0, %c0_1] : memref<128x128xf32, #tpu.memory_space<vmem>>, vector<128x128xf32>
    %c0_2 = arith.constant 0 : index
    %c0_3 = arith.constant 0 : index
    %4 = vector.load %arg5[%c0_2, %c0_3] : memref<128x128xf32, #tpu.memory_space<vmem>>, vector<128x128xf32>
    %cst = arith.constant dense<0.000000e+00> : vector<128x128xf32>
    %5 = tpu.matmul %3, %4, %cst {dimension_numbers = #tpu.dot_dimension_numbers<[1], [0], [0], [1], [0, 0, 1, 1], [], []>} : vector<128x128xf32>, vector<128x128xf32>, vector<128x128xf32> -> vector<128x128xf32>
    %c0_4 = arith.constant 0 : index
    %c0_5 = arith.constant 0 : index
    %6 = vector.load %arg5[%c0_4, %c0_5] : memref<128x128xf32, #tpu.memory_space<vmem>>, vector<128x128xf32>
    tpu.vector_store %arg5[%c0_4, %c0_5], %5 {strides = array<i32>} : memref<128x128xf32, #tpu.memory_space<vmem>>, vector<128x128xf32>,
    %c0_6 = arith.constant 0 : index
    %c0_7 = arith.constant 0 : index
    %7 = vector.load %arg4[%c0_6, %c0_7] : memref<128x128xf32, #tpu.memory_space<vmem>>, vector<128x128xf32>
    %8 = arith.addf %7, %5 : vector<128x128xf32>
    %c1_i32 = arith.constant 1 : i32
    %9 = arith.cmpi slt, %arg1, %c1_i32 : i32
    %10 = arith.extui %9 : i1 to i32
    %c0_i32_8 = arith.constant 0 : i32
    %11 = arith.cmpi ne, %10, %c0_i32_8 : i32
    scf.if %11 {
      %c0_11 = arith.constant 0 : index
      %c0_12 = arith.constant 0 : index
      %15 = vector.load %arg4[%c0_11, %c0_12] : memref<128x128xf32, #tpu.memory_space<vmem>>, vector<128x128xf32>
      tpu.vector_store %arg4[%c0_11, %c0_12], %8 {strides = array<i32>} : memref<128x128xf32, #tpu.memory_space<vmem>>, vector<128x128xf32>,
    } else {
    }
    %c1_i32_9 = arith.constant 1 : i32
    %12 = arith.cmpi eq, %arg1, %c1_i32_9 : i32
    %13 = arith.extui %12 : i1 to i32
    %c0_i32_10 = arith.constant 0 : i32
    %14 = arith.cmpi ne, %13, %c0_i32_10 : i32
    scf.if %14 {
      %cst_11 = arith.constant 0.333333343 : f32
      %15 = vector.broadcast %cst_11 : f32 to vector<128x128xf32>
      %16 = arith.mulf %8, %15 : vector<128x128xf32>
      %c0_12 = arith.constant 0 : index
      %c0_13 = arith.constant 0 : index
      %17 = vector.load %arg4[%c0_12, %c0_13] : memref<128x128xf32, #tpu.memory_space<vmem>>, vector<128x128xf32>
      tpu.vector_store %arg4[%c0_12, %c0_13], %16 {strides = array<i32>} : memref<128x128xf32, #tpu.memory_space<vmem>>, vector<128x128xf32>,
    } else {
    }
    return
  }
  func.func @transform_0(%arg0: i32, %arg1: i32) -> (i32, i32) {
    %c0_i32 = arith.constant 0 : i32
    %c0_i32_0 = arith.constant 0 : i32
    %c0_i32_1 = arith.constant 0 : i32
    return %c0_i32, %c0_i32_0 : i32, i32
  }
  func.func @transform_1(%arg0: i32, %arg1: i32) -> (i32, i32) {
    %c0_i32 = arith.constant 0 : i32
    %c0_i32_0 = arith.constant 0 : i32
    return %c0_i32, %arg0 : i32, i32
  }
  func.func @transform_2(%arg0: i32, %arg1: i32) -> (i32, i32) {
    %c0_i32 = arith.constant 0 : i32
    %c0_i32_0 = arith.constant 0 : i32
    return %c0_i32, %arg0 : i32, i32
  }
}

</mosaic_0001>

<llo_original>
// kernel: tpu_custom_call.1
$region0: #{tpu_custom_call.1}
  #allocation0 [shape = 'u32[]', space=smem, size = 0x4, offset = 0x4, fixed_abs, tag = 'smem constant byte address 0x4 - core index']
  #allocation1 [shape = 'u32[144,128]{1,0:T(1,128)}', space=vmem, size = 0x12000, scoped, tag = 'internal scratch']
  #allocation2 [shape = 'f32[128,128]{1,0:T(8,128)}', space=vmem, size = 0x10000, scoped, tag = 'scratch operand']
  %s0 = inlined_call_operand.hbm [shape: f32[128,128], index: 0, kind: input, shape index: {}]
  %s1 = inlined_call_operand.hbm [shape: f32[128,128], index: 1, kind: input, shape index: {}]
  %s2 = inlined_call_operand.hbm [shape: f32[128,128], index: 2, kind: output, shape index: {}]
  %s3 = sld [smem:[#allocation0]]
  $region61: #{tpu_custom_call.1} parent=0
    _
  %s5 = ssub.s32 1, %s3
  %s6 = scalar_select 0, %s5, %s3
  $region1: #{tpu_custom_call.1} parent=0
    #allocation3 [shape = 'u8[65536]{0}', space=vmem, size = 0x10000, scoped, tag = 'input window, operand 0, single buffered']
    #allocation4 [shape = 's32[2]{0}', space=sflag, size = 0x8, scoped, tag = 'scoped memory for tpu_custom_call.1']
    #allocation5 [shape = 's32[2]{0}', space=sflag, size = 0x8, scoped, tag = 'scoped memory for tpu_custom_call.1']
    #allocation6 [shape = 'u8[65536]{0}', space=vmem, size = 0x10000, scoped, tag = 'input window, operand 1, single buffered']
    #allocation7 [shape = 's32[1]{0}', space=sflag, size = 0x4, scoped, tag = 'scoped memory for tpu_custom_call.1']
    #allocation8 [shape = 'u8[65536]{0}', space=vmem, size = 0x10000, scoped, tag = 'output window, operand 0, single buffered']
    %7 = vsyncpa [#allocation4], 0
    %8 = vsyncpa [#allocation7], 0
    %9 = vsyncpa [#allocation5], 0
    loop: start=0, step=1, limit=4
    $region2: #{tpu_custom_call.1} parent=1 // loop_pre_header
      _
    $region3: #{tpu_custom_call.1} parent=1 // loop_header
      %s11 = sphi 0, %s15
      %p12 = scmp.ge.s32.totalorder %s11, 4
      %s18 = sphi 0, %s30
      %s19 = sphi 0, %s26
      %s20 = sphi 0, %s18
      %s21 = sphi 0, %s19
      %s22 = sphi 0, %s20
      %s23 = sphi 0, %s21
      %s31 = sphi 0, %s31
      %s33 = sphi 0, %s31
      %s34 = sphi 0, %s33
      %s48 = sphi 0, %s34
      %s54 = sphi 0, %s56
      %s57 = sphi 0, %s54
      %s58 = sphi 0, %s57
      %s74 = sphi 0, %s58
      %s80 = sphi 0, %s82
      %s83 = sphi 0, %s80
      %s84 = sphi 0, %s83
      %s100 = sphi 0, %s84
    $region4: #{tpu_custom_call.1} parent=1 // loop_header_branch
      %14 = sbr.rel (%p12) target = $region8
    $region5: #{tpu_custom_call.1} parent=1 // loop_body
      %s16 = ssub.s32 %s11, 1
      %s17 = ssub.s32 %s11, 2
      %s24 = sadd.s32 1, %s19
      %p25 = scmp.ge.s32.totalorder %s24, 2
      %s26 = scalar_select %p25, 0, %s24
      %s27 = sadd.s32 1, %s18
      %s28 = scalar_select %p25, %s27, %s18
      %p29 = scmp.ge.s32.totalorder %s28, 1
      %s30 = scalar_select %p29, 0, %s28
      %s32 = sadd.s32 %s31, 1
      %p35 = scmp.eq.s32.totalorder %s11, 1
      %p36 = scmp.ne.s32.totalorder %s31, %s33
      %p37 = scmp.eq.s32.totalorder %s11, 0
      %p38 = por %p36, %p37
      %p39 = scmp.ne.s32.totalorder %s31, %s33
      %p40 = scmp.eq.s32.totalorder %s16, 1
      %p41 = por %p39, %p40
      %p42 = scmp.ne.s32.totalorder %s33, %s34
      %p43 = scmp.eq.s32.totalorder %s16, 0
      %p44 = por %p42, %p43
      %p45 = scmp.ne.s32.totalorder %s33, %s34
      %p46 = scmp.eq.s32.totalorder %s17, 1
      %p47 = por %p45, %p46
      %p49 = scmp.ne.s32.totalorder %s34, %s48
      %p50 = scmp.eq.s32.totalorder %s17, 0
      %p51 = por %p49, %p50
      %s52 = ssub.s32 %s18, %s30
      %p53 = scmp.eq.s32.totalorder %s52, 0
      %s55 = sadd.s32 %s54, 1
      %s56 = scalar_select %p53, %s54, %s55
      %p59 = pneg %p53
      %p60 = scmp.eq.s32.totalorder %s11, 1
      %p61 = por %p59, %p60
      %p62 = scmp.ne.s32.totalorder %s54, %s57
      %p63 = scmp.eq.s32.totalorder %s11, 0
      %p64 = por %p62, %p63
      %p65 = scmp.ne.s32.totalorder %s54, %s57
      %p66 = scmp.eq.s32.totalorder %s16, 1
      %p67 = por %p65, %p66
      %p68 = scmp.ne.s32.totalorder %s57, %s58
      %p69 = scmp.eq.s32.totalorder %s16, 0
      %p70 = por %p68, %p69
      %p71 = scmp.ne.s32.totalorder %s57, %s58
      %p72 = scmp.eq.s32.totalorder %s17, 1
      %p73 = por %p71, %p72
      %p75 = scmp.ne.s32.totalorder %s58, %s74
      %p76 = scmp.eq.s32.totalorder %s17, 0
      %p77 = por %p75, %p76
      %s78 = ssub.s32 %s18, %s30
      %p79 = scmp.eq.s32.totalorder %s78, 0
      %s81 = sadd.s32 %s80, 1
      %s82 = scalar_select %p79, %s80, %s81
      %p85 = pneg %p79
      %p86 = scmp.eq.s32.totalorder %s11, 1
      %p87 = por %p85, %p86
      %p88 = scmp.ne.s32.totalorder %s80, %s83
      %p89 = scmp.eq.s32.totalorder %s11, 0
      %p90 = por %p88, %p89
      %p91 = scmp.ne.s32.totalorder %s80, %s83
      %p92 = scmp.eq.s32.totalorder %s16, 1
      %p93 = por %p91, %p92
      %p94 = scmp.ne.s32.totalorder %s83, %s84
      %p95 = scmp.eq.s32.totalorder %s16, 0
      %p96 = por %p94, %p95
      %p97 = scmp.ne.s32.totalorder %s83, %s84
      %p98 = scmp.eq.s32.totalorder %s17, 1
      %p99 = por %p97, %p98
      %p101 = scmp.ne.s32.totalorder %s84, %s100
      %p102 = scmp.eq.s32.totalorder %s17, 0
      %p103 = por %p101, %p102
      %p104 = scmp.le.s32.totalorder 1, %s11
      %p105 = scmp.lt.s32.totalorder %s11, 3
      %p106 = pnand %p104, %p105
      %p107 = pneg %p106
      // Predicated region
      $region9: #{tpu_custom_call.1} parent=5 // pred_check
        _
      $region10: #{tpu_custom_call.1} parent=5 // pred_check_branch
        %109 = sbr.rel (%p106) target = $region12
      $region11: #{tpu_custom_call.1} parent=5 // pred_region
        %s110 = ssub.s32 %s11, 1
        // Predicated region
        $region13: #{tpu_custom_call.1} parent=11 // pred_check
          %p111 = pneg %p44
        $region14: #{tpu_custom_call.1} parent=11 // pred_check_branch
          %113 = sbr.rel (%p111) target = $region16
        $region15: #{tpu_custom_call.1} parent=11 // pred_region
          %s115 = ssub.s32 2048, 2048
          %116 = vsyncadd [#allocation4], %s115
          %s117 = sshll.u32 [#allocation3], 4
          %s118 = int_to_ptr.vmem [resolvable:$true] %s117
          %123 = dma.hbm_to_vmem [thread:$0]  %s0, 2048, %s118, [#allocation4], 128, 128, 8
        $region16: #{tpu_custom_call.1} parent=11 // pred_fallthru
          _
        // Predicated region
        $region17: #{tpu_custom_call.1} parent=11 // pred_check
          %p124 = pneg %p70
        $region18: #{tpu_custom_call.1} parent=11 // pred_check_branch
          %126 = sbr.rel (%p124) target = $region20
        $region19: #{tpu_custom_call.1} parent=11 // pred_region
          %s128 = ssub.s32 2048, 2048
          %129 = vsyncadd [#allocation7], %s128
          %s130 = smul.addr %s20, 128
          %s131 = scalar_lea.hbm %s1, %s130
          %s132 = sshll.u32 [#allocation6], 4
          %s133 = int_to_ptr.vmem [resolvable:$true] %s132
          %138 = dma.hbm_to_vmem [thread:$0]  %s131, 2048, %s133, [#allocation7], 128, 128, 8
        $region20: #{tpu_custom_call.1} parent=11 // pred_fallthru
          _
      $region12: #{tpu_custom_call.1} parent=5 // pred_fallthru
        _
      %p139 = scmp.lt.s32.totalorder %s11, 2
      // Predicated region
      $region21: #{tpu_custom_call.1} parent=5 // pred_check
        %p140 = pneg %p139
      $region22: #{tpu_custom_call.1} parent=5 // pred_check_branch
        %142 = sbr.rel (%p140) target = $region24
      $region23: #{tpu_custom_call.1} parent=5 // pred_region
        _
      $region24: #{tpu_custom_call.1} parent=5 // pred_fallthru
        _
      %p143 = scmp.le.s32.totalorder 1, %s11
      %p144 = scmp.lt.s32.totalorder %s11, 3
      %p145 = pnand %p143, %p144
      %p146 = pneg %p145
      // Predicated region
      $region25: #{tpu_custom_call.1} parent=5 // pred_check
        _
      $region26: #{tpu_custom_call.1} parent=5 // pred_check_branch
        %148 = sbr.rel (%p145) target = $region28
      $region27: #{tpu_custom_call.1} parent=5 // pred_region
        %s149 = ssub.s32 %s11, 1
        // Predicated region
        $region29: #{tpu_custom_call.1} parent=27 // pred_check
          %p150 = pneg %p44
        $region30: #{tpu_custom_call.1} parent=27 // pred_check_branch
          %152 = sbr.rel (%p150) target = $region32
        $region31: #{tpu_custom_call.1} parent=27 // pred_region
          %153 = dma.done [#allocation4], 2048
        $region32: #{tpu_custom_call.1} parent=27 // pred_fallthru
          _
        // Predicated region
        $region33: #{tpu_custom_call.1} parent=27 // pred_check
          %p154 = pneg %p70
        $region34: #{tpu_custom_call.1} parent=27 // pred_check_branch
          %156 = sbr.rel (%p154) target = $region36
        $region35: #{tpu_custom_call.1} parent=27 // pred_region
          %157 = dma.done [#allocation7], 2048
        $region36: #{tpu_custom_call.1} parent=27 // pred_fallthru
          _
        %p158 = pneg %p44
        %p159 = pneg %p41
        %p160 = pneg %p70
        %p161 = pneg %p67
        %p162 = pneg %p96
        %p163 = pneg %p93
        %p164 = scmp.eq.s32.totalorder %s21, 0
        // Predicated region
        $region37: #{tpu_custom_call.1} parent=27 // pred_check
          %p165 = pneg %p164
        $region38: #{tpu_custom_call.1} parent=27 // pred_check_branch
          %167 = sbr.rel (%p165) target = $region40
        $region39: #{tpu_custom_call.1} parent=27 // pred_region
          %v168 = vld [vmem:[#allocation6] sm:$0xff]
          %v169 = vld [vmem:[#allocation6 + $0x8] sm:$0xff]
          %v170 = vld [vmem:[#allocation6 + $0x10] sm:$0xff]
          %v171 = vld [vmem:[#allocation6 + $0x18] sm:$0xff]
          %v172 = vld [vmem:[#allocation6 + $0x20] sm:$0xff]
          %v173 = vld [vmem:[#allocation6 + $0x28] sm:$0xff]
          %v174 = vld [vmem:[#allocation6 + $0x30] sm:$0xff]
          %v175 = vld [vmem:[#allocation6 + $0x38] sm:$0xff]
          %v176 = vld [vmem:[#allocation6 + $0x40] sm:$0xff]
          %v177 = vld [vmem:[#allocation6 + $0x48] sm:$0xff]
          %v178 = vld [vmem:[#allocation6 + $0x50] sm:$0xff]
          %v179 = vld [vmem:[#allocation6 + $0x58] sm:$0xff]
          %v180 = vld [vmem:[#allocation6 + $0x60] sm:$0xff]
          %v181 = vld [vmem:[#allocation6 + $0x68] sm:$0xff]
          %v182 = vld [vmem:[#allocation6 + $0x70] sm:$0xff]
          %v183 = vld [vmem:[#allocation6 + $0x78] sm:$0xff]
          %184 = vst [vmem:[#allocation2] sm:$0xff] %v168
          %185 = vst [vmem:[#allocation2 + $0x8] sm:$0xff] %v169
          %186 = vst [vmem:[#allocation2 + $0x10] sm:$0xff] %v170
          %187 = vst [vmem:[#allocation2 + $0x18] sm:$0xff] %v171
          %188 = vst [vmem:[#allocation2 + $0x20] sm:$0xff] %v172
          %189 = vst [vmem:[#allocation2 + $0x28] sm:$0xff] %v173
          %190 = vst [vmem:[#allocation2 + $0x30] sm:$0xff] %v174
          %191 = vst [vmem:[#allocation2 + $0x38] sm:$0xff] %v175
          %192 = vst [vmem:[#allocation2 + $0x40] sm:$0xff] %v176
          %193 = vst [vmem:[#allocation2 + $0x48] sm:$0xff] %v177
          %194 = vst [vmem:[#allocation2 + $0x50] sm:$0xff] %v178
          %195 = vst [vmem:[#allocation2 + $0x58] sm:$0xff] %v179
          %196 = vst [vmem:[#allocation2 + $0x60] sm:$0xff] %v180
          %197 = vst [vmem:[#allocation2 + $0x68] sm:$0xff] %v181
          %198 = vst [vmem:[#allocation2 + $0x70] sm:$0xff] %v182
          %199 = vst [vmem:[#allocation2 + $0x78] sm:$0xff] %v183
          %200 = vst [vmem:[#allocation8] sm:$0xff] %v168
          %201 = vst [vmem:[#allocation8 + $0x8] sm:$0xff] %v169
          %202 = vst [vmem:[#allocation8 + $0x10] sm:$0xff] %v170
          %203 = vst [vmem:[#allocation8 + $0x18] sm:$0xff] %v171
          %204 = vst [vmem:[#allocation8 + $0x20] sm:$0xff] %v172
          %205 = vst [vmem:[#allocation8 + $0x28] sm:$0xff] %v173
          %206 = vst [vmem:[#allocation8 + $0x30] sm:$0xff] %v174
          %207 = vst [vmem:[#allocation8 + $0x38] sm:$0xff] %v175
          %208 = vst [vmem:[#allocation8 + $0x40] sm:$0xff] %v176
          %209 = vst [vmem:[#allocation8 + $0x48] sm:$0xff] %v177
          %210 = vst [vmem:[#allocation8 + $0x50] sm:$0xff] %v178
          %211 = vst [vmem:[#allocation8 + $0x58] sm:$0xff] %v179
          %212 = vst [vmem:[#allocation8 + $0x60] sm:$0xff] %v180
          %213 = vst [vmem:[#allocation8 + $0x68] sm:$0xff] %v181
          %214 = vst [vmem:[#allocation8 + $0x70] sm:$0xff] %v182
          %215 = vst [vmem:[#allocation8 + $0x78] sm:$0xff] %v183
        $region40: #{tpu_custom_call.1} parent=27 // pred_fallthru
          _
        %v216 = vld [vmem:[#allocation3] sm:$0xff]
        %v217 = vld [vmem:[#allocation3 + $0x8] sm:$0xff]
        %v218 = vld [vmem:[#allocation3 + $0x10] sm:$0xff]
        %v219 = vld [vmem:[#allocation3 + $0x18] sm:$0xff]
        %v220 = vld [vmem:[#allocation3 + $0x20] sm:$0xff]
        %v221 = vld [vmem:[#allocation3 + $0x28] sm:$0xff]
        %v222 = vld [vmem:[#allocation3 + $0x30] sm:$0xff]
        %v223 = vld [vmem:[#allocation3 + $0x38] sm:$0xff]
        %v224 = vld [vmem:[#allocation3 + $0x40] sm:$0xff]
        %v225 = vld [vmem:[#allocation3 + $0x48] sm:$0xff]
        %v226 = vld [vmem:[#allocation3 + $0x50] sm:$0xff]
        %v227 = vld [vmem:[#allocation3 + $0x58] sm:$0xff]
        %v228 = vld [vmem:[#allocation3 + $0x60] sm:$0xff]
        %v229 = vld [vmem:[#allocation3 + $0x68] sm:$0xff]
        %v230 = vld [vmem:[#allocation3 + $0x70] sm:$0xff]
        %v231 = vld [vmem:[#allocation3 + $0x78] sm:$0xff]
        %v232 = vld [vmem:[#allocation2] sm:$0xff]
        %v233 = vld [vmem:[#allocation2 + $0x8] sm:$0xff]
        %v234 = vld [vmem:[#allocation2 + $0x10] sm:$0xff]
        %v235 = vld [vmem:[#allocation2 + $0x18] sm:$0xff]
        %v236 = vld [vmem:[#allocation2 + $0x20] sm:$0xff]
        %v237 = vld [vmem:[#allocation2 + $0x28] sm:$0xff]
        %v238 = vld [vmem:[#allocation2 + $0x30] sm:$0xff]
        %v239 = vld [vmem:[#allocation2 + $0x38] sm:$0xff]
        %v240 = vld [vmem:[#allocation2 + $0x40] sm:$0xff]
        %v241 = vld [vmem:[#allocation2 + $0x48] sm:$0xff]
        %v242 = vld [vmem:[#allocation2 + $0x50] sm:$0xff]
        %v243 = vld [vmem:[#allocation2 + $0x58] sm:$0xff]
        %v244 = vld [vmem:[#allocation2 + $0x60] sm:$0xff]
        %v245 = vld [vmem:[#allocation2 + $0x68] sm:$0xff]
        %v246 = vld [vmem:[#allocation2 + $0x70] sm:$0xff]
        %v247 = vld [vmem:[#allocation2 + $0x78] sm:$0xff]
        %248 = vmatprep.subr.mxu0 0.0
        %249 = vmatpush1.msra.mxu0 %v247
        %250 = vmatprep.subr.mxu0 0.0
        %251 = vmatpush1.msra.mxu0 %v246
        %252 = vmatprep.subr.mxu0 0.0
        %253 = vmatpush1.msra.mxu0 %v245
        %254 = vmatprep.subr.mxu0 0.0
        %255 = vmatpush1.msra.mxu0 %v244
        %256 = vmatprep.subr.mxu0 0.0
        %257 = vmatpush1.msra.mxu0 %v243
        %258 = vmatprep.subr.mxu0 0.0
        %259 = vmatpush1.msra.mxu0 %v242
        %260 = vmatprep.subr.mxu0 0.0
        %261 = vmatpush1.msra.mxu0 %v241
        %262 = vmatprep.subr.mxu0 0.0
        %263 = vmatpush1.msra.mxu0 %v240
        %264 = vmatprep.subr.mxu0 0.0
        %265 = vmatpush1.msra.mxu0 %v239
        %266 = vmatprep.subr.mxu0 0.0
        %267 = vmatpush1.msra.mxu0 %v238
        %268 = vmatprep.subr.mxu0 0.0
        %269 = vmatpush1.msra.mxu0 %v237
        %270 = vmatprep.subr.mxu0 0.0
        %271 = vmatpush1.msra.mxu0 %v236
        %272 = vmatprep.subr.mxu0 0.0
        %273 = vmatpush1.msra.mxu0 %v235
        %274 = vmatprep.subr.mxu0 0.0
        %275 = vmatpush1.msra.mxu0 %v234
        %276 = vmatprep.subr.mxu0 0.0
        %277 = vmatpush1.msra.mxu0 %v233
        %278 = vmatprep.subr.mxu0 0.0
        %279 = vmatpush1.msra.mxu0 %v232
        %280 = vmatprep.subr.mxu0 0.0
        %281 = vmatpush2.msra.mxu0 0.0
        %282 = vmatprep.subr.mxu0 0.0
        %283 = vmatpush2.msra.mxu0 0.0
        %284 = vmatprep.subr.mxu0 0.0
        %285 = vmatpush2.msra.mxu0 0.0
        %286 = vmatprep.subr.mxu0 0.0
        %287 = vmatpush2.msra.mxu0 0.0
        %288 = vmatprep.subr.mxu0 0.0
        %289 = vmatpush2.msra.mxu0 0.0
        %290 = vmatprep.subr.mxu0 0.0
        %291 = vmatpush2.msra.mxu0 0.0
        %292 = vmatprep.subr.mxu0 0.0
        %293 = vmatpush2.msra.mxu0 0.0
        %294 = vmatprep.subr.mxu0 0.0
        %295 = vmatpush2.msra.mxu0 0.0
        %296 = vmatprep.subr.mxu0 0.0
        %297 = vmatpush2.msra.mxu0 0.0
        %298 = vmatprep.subr.mxu0 0.0
        %299 = vmatpush2.msra.mxu0 0.0
        %300 = vmatprep.subr.mxu0 0.0
        %301 = vmatpush2.msra.mxu0 0.0
        %302 = vmatprep.subr.mxu0 0.0
        %303 = vmatpush2.msra.mxu0 0.0
        %304 = vmatprep.subr.mxu0 0.0
        %305 = vmatpush2.msra.mxu0 0.0
        %306 = vmatprep.subr.mxu0 0.0
        %307 = vmatpush2.msra.mxu0 0.0
        %308 = vmatprep.subr.mxu0 0.0
        %309 = vmatpush2.msra.mxu0 0.0
        %310 = vmatprep.subr.mxu0 0.0
        %311 = vmatpush2.msra.mxu0 0.0
        %312 = vmatprep.mubr.f32.mxu0 0.0
        %313 = vmatmul.mubr.f32.gmra.mxu0 %v216
        %v314 = vpop.f32.mrf.mxu0
        %v315 = vadd.f32 0.0, %v314
        %v316 = vpop.f32.mrf.mxu0
        %317 = vmatprep.mubr.f32.mxu0 0.0
        %318 = vmatmul.mubr.f32.gmra.mxu0 %v217
        %v319 = vpop.f32.mrf.mxu0
        %v320 = vadd.f32 0.0, %v319
        %v321 = vpop.f32.mrf.mxu0
        %322 = vmatprep.mubr.f32.mxu0 0.0
        %323 = vmatmul.mubr.f32.gmra.mxu0 %v218
        %v324 = vpop.f32.mrf.mxu0
        %v325 = vadd.f32 0.0, %v324
        %v326 = vpop.f32.mrf.mxu0
        %327 = vmatprep.mubr.f32.mxu0 0.0
        %328 = vmatmul.mubr.f32.gmra.mxu0 %v219
        %v329 = vpop.f32.mrf.mxu0
        %v330 = vadd.f32 0.0, %v329
        %v331 = vpop.f32.mrf.mxu0
        %332 = vmatprep.mubr.f32.mxu0 0.0
        %333 = vmatmul.mubr.f32.gmra.mxu0 %v220
        %v334 = vpop.f32.mrf.mxu0
        %v335 = vadd.f32 0.0, %v334
        %v336 = vpop.f32.mrf.mxu0
        %337 = vmatprep.mubr.f32.mxu0 0.0
        %338 = vmatmul.mubr.f32.gmra.mxu0 %v221
        %v339 = vpop.f32.mrf.mxu0
        %v340 = vadd.f32 0.0, %v339
        %v341 = vpop.f32.mrf.mxu0
        %342 = vmatprep.mubr.f32.mxu0 0.0
        %343 = vmatmul.mubr.f32.gmra.mxu0 %v222
        %v344 = vpop.f32.mrf.mxu0
        %v345 = vadd.f32 0.0, %v344
        %v346 = vpop.f32.mrf.mxu0
        %347 = vmatprep.mubr.f32.mxu0 0.0
        %348 = vmatmul.mubr.f32.gmra.mxu0 %v223
        %v349 = vpop.f32.mrf.mxu0
        %v350 = vadd.f32 0.0, %v349
        %v351 = vpop.f32.mrf.mxu0
        %352 = vmatprep.mubr.f32.mxu0 0.0
        %353 = vmatmul.mubr.f32.gmra.mxu0 %v224
        %v354 = vpop.f32.mrf.mxu0
        %v355 = vadd.f32 0.0, %v354
        %v356 = vpop.f32.mrf.mxu0
        %357 = vmatprep.mubr.f32.mxu0 0.0
        %358 = vmatmul.mubr.f32.gmra.mxu0 %v225
        %v359 = vpop.f32.mrf.mxu0
        %v360 = vadd.f32 0.0, %v359
        %v361 = vpop.f32.mrf.mxu0
        %362 = vmatprep.mubr.f32.mxu0 0.0
        %363 = vmatmul.mubr.f32.gmra.mxu0 %v226
        %v364 = vpop.f32.mrf.mxu0
        %v365 = vadd.f32 0.0, %v364
        %v366 = vpop.f32.mrf.mxu0
        %367 = vmatprep.mubr.f32.mxu0 0.0
        %368 = vmatmul.mubr.f32.gmra.mxu0 %v227
        %v369 = vpop.f32.mrf.mxu0
        %v370 = vadd.f32 0.0, %v369
        %v371 = vpop.f32.mrf.mxu0
        %372 = vmatprep.mubr.f32.mxu0 0.0
        %373 = vmatmul.mubr.f32.gmra.mxu0 %v228
        %v374 = vpop.f32.mrf.mxu0
        %v375 = vadd.f32 0.0, %v374
        %v376 = vpop.f32.mrf.mxu0
        %377 = vmatprep.mubr.f32.mxu0 0.0
        %378 = vmatmul.mubr.f32.gmra.mxu0 %v229
        %v379 = vpop.f32.mrf.mxu0
        %v380 = vadd.f32 0.0, %v379
        %v381 = vpop.f32.mrf.mxu0
        %382 = vmatprep.mubr.f32.mxu0 0.0
        %383 = vmatmul.mubr.f32.gmra.mxu0 %v230
        %v384 = vpop.f32.mrf.mxu0
        %v385 = vadd.f32 0.0, %v384
        %v386 = vpop.f32.mrf.mxu0
        %387 = vmatprep.mubr.f32.mxu0 0.0
        %388 = vmatmul.mubr.f32.gmra.mxu0 %v231
        %v389 = vpop.f32.mrf.mxu0
        %v390 = vadd.f32 0.0, %v389
        %v391 = vpop.f32.mrf.mxu0
        %392 = vdwg.mxu0
        %393 = vst [vmem:[#allocation2] sm:$0xff] %v315
        %394 = vst [vmem:[#allocation2 + $0x8] sm:$0xff] %v320
        %395 = vst [vmem:[#allocation2 + $0x10] sm:$0xff] %v325
        %396 = vst [vmem:[#allocation2 + $0x18] sm:$0xff] %v330
        %397 = vst [vmem:[#allocation2 + $0x20] sm:$0xff] %v335
        %398 = vst [vmem:[#allocation2 + $0x28] sm:$0xff] %v340
        %399 = vst [vmem:[#allocation2 + $0x30] sm:$0xff] %v345
        %400 = vst [vmem:[#allocation2 + $0x38] sm:$0xff] %v350
        %401 = vst [vmem:[#allocation2 + $0x40] sm:$0xff] %v355
        %402 = vst [vmem:[#allocation2 + $0x48] sm:$0xff] %v360
        %403 = vst [vmem:[#allocation2 + $0x50] sm:$0xff] %v365
        %404 = vst [vmem:[#allocation2 + $0x58] sm:$0xff] %v370
        %405 = vst [vmem:[#allocation2 + $0x60] sm:$0xff] %v375
        %406 = vst [vmem:[#allocation2 + $0x68] sm:$0xff] %v380
        %407 = vst [vmem:[#allocation2 + $0x70] sm:$0xff] %v385
        %408 = vst [vmem:[#allocation2 + $0x78] sm:$0xff] %v390
        %v409 = vld [vmem:[#allocation8] sm:$0xff]
        %v410 = vld [vmem:[#allocation8 + $0x8] sm:$0xff]
        %v411 = vld [vmem:[#allocation8 + $0x10] sm:$0xff]
        %v412 = vld [vmem:[#allocation8 + $0x18] sm:$0xff]
        %v413 = vld [vmem:[#allocation8 + $0x20] sm:$0xff]
        %v414 = vld [vmem:[#allocation8 + $0x28] sm:$0xff]
        %v415 = vld [vmem:[#allocation8 + $0x30] sm:$0xff]
        %v416 = vld [vmem:[#allocation8 + $0x38] sm:$0xff]
        %v417 = vld [vmem:[#allocation8 + $0x40] sm:$0xff]
        %v418 = vld [vmem:[#allocation8 + $0x48] sm:$0xff]
        %v419 = vld [vmem:[#allocation8 + $0x50] sm:$0xff]
        %v420 = vld [vmem:[#allocation8 + $0x58] sm:$0xff]
        %v421 = vld [vmem:[#allocation8 + $0x60] sm:$0xff]
        %v422 = vld [vmem:[#allocation8 + $0x68] sm:$0xff]
        %v423 = vld [vmem:[#allocation8 + $0x70] sm:$0xff]
        %v424 = vld [vmem:[#allocation8 + $0x78] sm:$0xff]
        %v425 = vadd.f32 %v409, %v315
        %v426 = vadd.f32 %v410, %v320
        %v427 = vadd.f32 %v411, %v325
        %v428 = vadd.f32 %v412, %v330
        %v429 = vadd.f32 %v413, %v335
        %v430 = vadd.f32 %v414, %v340
        %v431 = vadd.f32 %v415, %v345
        %v432 = vadd.f32 %v416, %v350
        %v433 = vadd.f32 %v417, %v355
        %v434 = vadd.f32 %v418, %v360
        %v435 = vadd.f32 %v419, %v365
        %v436 = vadd.f32 %v420, %v370
        %v437 = vadd.f32 %v421, %v375
        %v438 = vadd.f32 %v422, %v380
        %v439 = vadd.f32 %v423, %v385
        %v440 = vadd.f32 %v424, %v390
        %p441 = scmp.lt.s32.totalorder %s21, 1
        // Predicated region
        $region41: #{tpu_custom_call.1} parent=27 // pred_check
          %p442 = pneg %p441
        $region42: #{tpu_custom_call.1} parent=27 // pred_check_branch
          %444 = sbr.rel (%p442) target = $region44
        $region43: #{tpu_custom_call.1} parent=27 // pred_region
          %445 = vst [vmem:[#allocation8] sm:$0xff] %v425
          %446 = vst [vmem:[#allocation8 + $0x8] sm:$0xff] %v426
          %447 = vst [vmem:[#allocation8 + $0x10] sm:$0xff] %v427
          %448 = vst [vmem:[#allocation8 + $0x18] sm:$0xff] %v428
          %449 = vst [vmem:[#allocation8 + $0x20] sm:$0xff] %v429
          %450 = vst [vmem:[#allocation8 + $0x28] sm:$0xff] %v430
          %451 = vst [vmem:[#allocation8 + $0x30] sm:$0xff] %v431
          %452 = vst [vmem:[#allocation8 + $0x38] sm:$0xff] %v432
          %453 = vst [vmem:[#allocation8 + $0x40] sm:$0xff] %v433
          %454 = vst [vmem:[#allocation8 + $0x48] sm:$0xff] %v434
          %455 = vst [vmem:[#allocation8 + $0x50] sm:$0xff] %v435
          %456 = vst [vmem:[#allocation8 + $0x58] sm:$0xff] %v436
          %457 = vst [vmem:[#allocation8 + $0x60] sm:$0xff] %v437
          %458 = vst [vmem:[#allocation8 + $0x68] sm:$0xff] %v438
          %459 = vst [vmem:[#allocation8 + $0x70] sm:$0xff] %v439
          %460 = vst [vmem:[#allocation8 + $0x78] sm:$0xff] %v440
        $region44: #{tpu_custom_call.1} parent=27 // pred_fallthru
          _
        %p461 = scmp.eq.s32.totalorder %s21, 1
        // Predicated region
        $region45: #{tpu_custom_call.1} parent=27 // pred_check
          %p462 = pneg %p461
        $region46: #{tpu_custom_call.1} parent=27 // pred_check_branch
          %464 = sbr.rel (%p462) target = $region48
        $region47: #{tpu_custom_call.1} parent=27 // pred_region
          %v465 = vmul.f32 %v425, 0.33333334
          %v466 = vmul.f32 %v426, 0.33333334
          %v467 = vmul.f32 %v427, 0.33333334
          %v468 = vmul.f32 %v428, 0.33333334
          %v469 = vmul.f32 %v429, 0.33333334
          %v470 = vmul.f32 %v430, 0.33333334
          %v471 = vmul.f32 %v431, 0.33333334
          %v472 = vmul.f32 %v432, 0.33333334
          %v473 = vmul.f32 %v433, 0.33333334
          %v474 = vmul.f32 %v434, 0.33333334
          %v475 = vmul.f32 %v435, 0.33333334
          %v476 = vmul.f32 %v436, 0.33333334
          %v477 = vmul.f32 %v437, 0.33333334
          %v478 = vmul.f32 %v438, 0.33333334
          %v479 = vmul.f32 %v439, 0.33333334
          %v480 = vmul.f32 %v440, 0.33333334
          %481 = vst [vmem:[#allocation8] sm:$0xff] %v465
          %482 = vst [vmem:[#allocation8 + $0x8] sm:$0xff] %v466
          %483 = vst [vmem:[#allocation8 + $0x10] sm:$0xff] %v467
          %484 = vst [vmem:[#allocation8 + $0x18] sm:$0xff] %v468
          %485 = vst [vmem:[#allocation8 + $0x20] sm:$0xff] %v469
          %486 = vst [vmem:[#allocation8 + $0x28] sm:$0xff] %v470
          %487 = vst [vmem:[#allocation8 + $0x30] sm:$0xff] %v471
          %488 = vst [vmem:[#allocation8 + $0x38] sm:$0xff] %v472
          %489 = vst [vmem:[#allocation8 + $0x40] sm:$0xff] %v473
          %490 = vst [vmem:[#allocation8 + $0x48] sm:$0xff] %v474
          %491 = vst [vmem:[#allocation8 + $0x50] sm:$0xff] %v475
          %492 = vst [vmem:[#allocation8 + $0x58] sm:$0xff] %v476
          %493 = vst [vmem:[#allocation8 + $0x60] sm:$0xff] %v477
          %494 = vst [vmem:[#allocation8 + $0x68] sm:$0xff] %v478
          %495 = vst [vmem:[#allocation8 + $0x70] sm:$0xff] %v479
          %496 = vst [vmem:[#allocation8 + $0x78] sm:$0xff] %v480
        $region48: #{tpu_custom_call.1} parent=27 // pred_fallthru
          _
        // Predicated region
        $region49: #{tpu_custom_call.1} parent=27 // pred_check
          %p497 = pneg %p93
        $region50: #{tpu_custom_call.1} parent=27 // pred_check_branch
          %499 = sbr.rel (%p497) target = $region52
        $region51: #{tpu_custom_call.1} parent=27 // pred_region
          %s501 = ssub.s32 2048, 2048
          %502 = vsyncadd [#allocation5], %s501
          %s503 = smul.addr %s20, 128
          %s504 = scalar_lea.hbm %s2, %s503
          %s505 = sshll.u32 [#allocation8], 4
          %s506 = int_to_ptr.vmem [resolvable:$true] %s505
          %511 = dma.vmem_to_hbm [thread:$0]  %s506, 2048, %s504, [#allocation5], 128, 128, 8
        $region52: #{tpu_custom_call.1} parent=27 // pred_fallthru
          _
        // Predicated region
        $region53: #{tpu_custom_call.1} parent=27 // pred_check
          %p512 = pneg %p93
        $region54: #{tpu_custom_call.1} parent=27 // pred_check_branch
          %514 = sbr.rel (%p512) target = $region56
        $region55: #{tpu_custom_call.1} parent=27 // pred_region
          %515 = dma.done [#allocation5], 2048
        $region56: #{tpu_custom_call.1} parent=27 // pred_fallthru
          _
      $region28: #{tpu_custom_call.1} parent=5 // pred_fallthru
        _
      %p516 = scmp.le.s32.totalorder 2, %s11
      // Predicated region
      $region57: #{tpu_custom_call.1} parent=5 // pred_check
        %p517 = pneg %p516
      $region58: #{tpu_custom_call.1} parent=5 // pred_check_branch
        %519 = sbr.rel (%p517) target = $region60
      $region59: #{tpu_custom_call.1} parent=5 // pred_region
        %s520 = ssub.s32 %s11, 2
      $region60: #{tpu_custom_call.1} parent=5 // pred_fallthru
        _
    $region6: #{tpu_custom_call.1} parent=1 // loop_footer
      %s15 = sadd.s32 1, %s11
    $region7: #{tpu_custom_call.1} parent=1 // loop_footer_branch
      %10 = sbr.rel target = $region3
    $region8: #{tpu_custom_call.1} parent=1 // loop_exit
      _
    %521 = vsyncpa [#allocation4], 1
    %s522 = scalar_lea.sflag [#allocation4], 1
    %523 = vsyncpa %s522, 1
    %524 = vsyncpa [#allocation7], 1
    %525 = vsyncpa [#allocation5], 1
    %s526 = scalar_lea.sflag [#allocation5], 1
    %527 = vsyncpa %s526, 1

</llo_original>
